<compile_context>
chip_gen: v7x
topology: tpu7x:2x2x1
jax: 0.10.0
libtpu: 0.0.40
codegen_flags: <defaults>
</compile_context>

<pallas_src>
import jax
import jax.numpy as jnp
from jax.experimental import pallas as pl
from jax.experimental.pallas import tpu as pltpu


_MIB = 1024 * 1024
# Conservative resident-tile budget so one config fits every generation
# (v7x has only 64 MiB VMEM per TensorCore; scoped defaults are 16/32/32 MiB).
_VMEM_TILE_BUDGET = 40 * _MIB


def _round_up(n, m):
    return ((n + m - 1) // m) * m


def _pick_tile(dim, align, max_tile):
    """Tile size for one axis.

    * If the whole axis fits under max_tile, use the full axis (single block,
      no padding needed, no (8,128) alignment requirement).
    * Otherwise pick the multiple of `align` (<= max_tile) that minimizes the
      zero-padding of `dim` up to a tile multiple; among ties prefer multiples
      of 256 (full width on the 2x256x256 v6e/v7x MXU), then larger tiles.
    """
    if dim <= max_tile:
        return dim
    best_key, best_t = None, align
    for t in range(align, max_tile + 1, align):
        pad = (-dim) % t
        key = (pad, 0 if t % 256 == 0 else 1, -t)
        if best_key is None or key < best_key:
            best_key, best_t = key, t
    return best_t


def _footprint_bytes(tm, tk, tn, x_bytes, w_bytes, out_bytes, use_acc):
    """Double-buffered VMEM footprint of one grid step's resident tiles."""
    fp = 2 * tm * tk * x_bytes          # x tiles (double-buffered)
    fp += 2 * tk * tn * w_bytes         # weight tiles
    fp += 2 * tn * 4                    # bias tiles (f32)
    fp += 2 * tm * tn * out_bytes       # output tiles
    if use_acc:
        fp += tm * tn * 4               # f32 accumulator scratch
    return fp


# ---------------------------------------------------------------------------
# Kernels
# ---------------------------------------------------------------------------
def _linear_kernel_f32(x_ref, w_ref, b_ref, o_ref):
    """float32 output: accumulate directly into the VMEM-resident output tile.

    x_ref: (tm, tk)   activations
    w_ref: (tk, tn)   weight, already (in, out) layout -> canonical MXU matmul
    b_ref: (1, tn)    bias (f32)
    o_ref: (tm, tn)   f32 output; resident across the K grid axis.
    """
    @pl.when(pl.program_id(2) == 0)
    def _init():
        o_ref[...] = jnp.broadcast_to(b_ref[...].astype(jnp.float32), o_ref.shape)

    o_ref[...] += jnp.dot(x_ref[...], w_ref[...],
                          preferred_element_type=jnp.float32)


def _linear_kernel_acc(x_ref, w_ref, b_ref, o_ref, acc_ref):
    """Low-precision output (e.g. bf16): f32 scratch accumulator, cast at the end."""
    k = pl.program_id(2)

    @pl.when(k == 0)
    def _init():
        acc_ref[...] = jnp.broadcast_to(b_ref[...].astype(jnp.float32),
                                        acc_ref.shape)

    acc_ref[...] += jnp.dot(x_ref[...], w_ref[...],
                            preferred_element_type=jnp.float32)

    @pl.when(k == pl.num_programs(2) - 1)
    def _finalize():
        o_ref[...] = acc_ref[...].astype(o_ref.dtype)


# ---------------------------------------------------------------------------
# Wrappers
# ---------------------------------------------------------------------------
def prepare_linear_params(weight, bias, *, compute_dtype=None):
    """One-time parameter prep, amortized across forward calls.

    weight: (out, in) PyTorch nn.Linear layout.
    Returns (w_kn, bias2d) with w_kn in (in, out) layout so the kernel feeds
    the MXU the canonical (tm,tk)x(tk,tn) shape; bias is kept in f32.
    """
    w_kn = jnp.asarray(weight).T                       # (K, N)
    if compute_dtype is not None:
        w_kn = w_kn.astype(compute_dtype)
    bias2d = jnp.asarray(bias).astype(jnp.float32).reshape(1, -1)
    return w_kn, bias2d


def linear_forward(x, w_kn, bias2d, *, compute_dtype=None,
                   tm_max=512, tn_max=512, tk_max=2048):
    """y = x @ w_kn + bias  (w_kn is the (in, out)-layout weight from
    prepare_linear_params). Equivalent to nn.Linear forward."""
    out_dtype = x.dtype
    if compute_dtype is not None:
        x = x.astype(compute_dtype)

    M, K = x.shape
    Kw, N = w_kn.shape
    assert K == Kw and bias2d.shape == (1, N)

    use_acc = out_dtype != jnp.float32
    x_bytes = jnp.dtype(x.dtype).itemsize
    w_bytes = jnp.dtype(w_kn.dtype).itemsize
    out_bytes = jnp.dtype(out_dtype).itemsize

    # Large tiles (high arithmetic intensity, few ~0.35us grid steps), shrunk
    # K -> N -> M only if the resident footprint exceeds the per-core budget.
    tm = _pick_tile(M, 8, tm_max)
    tn = _pick_tile(N, 128, tn_max)
    tk = _pick_tile(K, 128, tk_max)
    while (_footprint_bytes(tm, tk, tn, x_bytes, w_bytes, out_bytes, use_acc)
           > _VMEM_TILE_BUDGET and tk_max > 128):
        tk_max = max(128, tk_max // 2)
        tk = _pick_tile(K, 128, tk_max)
    while (_footprint_bytes(tm, tk, tn, x_bytes, w_bytes, out_bytes, use_acc)
           > _VMEM_TILE_BUDGET and tn_max > 128):
        tn_max = max(128, tn_max // 2)
        tn = _pick_tile(N, 128, tn_max)
    while (_footprint_bytes(tm, tk, tn, x_bytes, w_bytes, out_bytes, use_acc)
           > _VMEM_TILE_BUDGET and tm_max > 8):
        tm_max = max(8, tm_max // 2)
        tm = _pick_tile(M, 8, tm_max)

    Mp, Kp, Np = _round_up(M, tm), _round_up(K, tk), _round_up(N, tn)

    # Tile selection minimizes padding; pad only in the (rare) ragged case.
    # Zero-padded K contributes nothing to the dot; padded rows/cols sliced off.
    if (Mp, Kp) != (M, K):
        x = jnp.pad(x, ((0, Mp - M), (0, Kp - K)))
    if (Kp, Np) != (K, N):
        w_kn = jnp.pad(w_kn, ((0, Kp - K), (0, Np - N)))
    if Np != N:
        bias2d = jnp.pad(bias2d, ((0, 0), (0, Np - N)))

    grid = (Mp // tm, Np // tn, Kp // tk)
    kernel = _linear_kernel_acc if use_acc else _linear_kernel_f32
    scratch = [pltpu.VMEM((tm, tn), jnp.float32)] if use_acc else []

    fp = _footprint_bytes(tm, tk, tn, x_bytes, w_bytes, out_bytes, use_acc)
    vmem_limit = int(min(48 * _MIB, max(32 * _MIB, fp + 8 * _MIB)))

    cost = pl.CostEstimate(
        flops=2 * Mp * Np * Kp,
        transcendentals=0,
        bytes_accessed=(Mp * Kp * x_bytes + Kp * Np * w_bytes
                        + Mp * Np * out_bytes + Np * 4),
    )

    out = pl.pallas_call(
        kernel,
        out_shape=jax.ShapeDtypeStruct((Mp, Np), out_dtype),
        grid=grid,
        in_specs=[
            pl.BlockSpec((tm, tk), lambda i, j, k: (i, k)),   # x      (M, K)
            pl.BlockSpec((tk, tn), lambda i, j, k: (k, j)),   # weight (K, N)
            pl.BlockSpec((1, tn), lambda i, j, k: (0, j)),    # bias   (1, N)
        ],
        out_specs=pl.BlockSpec((tm, tn), lambda i, j, k: (i, j)),
        scratch_shapes=scratch,
        compiler_params=pltpu.CompilerParams(
            dimension_semantics=("parallel", "parallel", "arbitrary"),
            vmem_limit_bytes=vmem_limit,
        ),
        cost_estimate=cost,
    )(x, w_kn, bias2d)

    if (Mp, Np) != (M, N):
        out = out[:M, :N]
    return out


def network_forward(x, weight, bias, *, compute_dtype=None, **tile_kwargs):
    """Convenience wrapper taking the PyTorch-layout (out, in) weight directly.
    For repeated calls, prefer calling prepare_linear_params once and reusing."""
    w_kn, bias2d = prepare_linear_params(weight, bias, compute_dtype=compute_dtype)
    return linear_forward(x, w_kn, bias2d, compute_dtype=compute_dtype,
                          **tile_kwargs)


if __name__ == "__main__":
    key = jax.random.PRNGKey(0)
    kx, kw, kb, kx2, kw2, kb2 = jax.random.split(key, 6)

    # --- Small shapes consistent with Network(input_size=32, output_size=16).
    batch, input_size, output_size = 8, 32, 16
    x = jax.random.normal(kx, (batch, input_size), dtype=jnp.float32)
    weight = jax.random.normal(kw, (output_size, input_size), dtype=jnp.float32) * 0.1
    bias = jax.random.normal(kb, (output_size,), dtype=jnp.float32) * 0.1

    w_kn, b2d = prepare_linear_params(weight, bias)   # one-time param prep
    y = linear_forward(x, w_kn, b2d)
    jax.block_until_ready(y)
    y_ref = x @ weight.T + bias
    assert y.shape == (batch, output_size)
    assert jnp.allclose(y, y_ref, atol=1e-5, rtol=1e-5)

    # --- Larger shape: exercises the tiled, multi-K-step path with the
    #     direct-accumulate-into-output f32 kernel.
    M2, K2, N2 = 1024, 4096, 1024
    x2 = jax.random.normal(kx2, (M2, K2), dtype=jnp.float32) * 0.05
    w2 = jax.random.normal(kw2, (N2, K2), dtype=jnp.float32) * 0.05
    b2 = jax.random.normal(kb2, (N2,), dtype=jnp.float32) * 0.05
    y2 = network_forward(x2, w2, b2)
    jax.block_until_ready(y2)
    y2_ref = x2 @ w2.T + b2
    rel = jnp.linalg.norm(y2 - y2_ref) / (jnp.linalg.norm(y2_ref) + 1e-9)
    assert y2.shape == (M2, N2) and float(rel) < 1e-2, float(rel)

    # --- bf16 compute path (f32 accumulation): exercises the scratch kernel.
    y3 = network_forward(x.astype(jnp.bfloat16), weight, bias,
                         compute_dtype=jnp.bfloat16)
    jax.block_until_ready(y3)
    assert jnp.allclose(y3.astype(jnp.float32), y_ref, atol=5e-2, rtol=5e-2)

    print("KERNEL_OK")
</pallas_src>

<mosaic_0001>
module attributes {stable_mosaic.version = 11 : i64} {
  func.func @_linear_kernel_f32(%arg0: i32, %arg1: i32, %arg2: i32, %arg3: memref<8x32xf32, #tpu.memory_space<vmem>>, %arg4: memref<32x16xf32, #tpu.memory_space<vmem>>, %arg5: memref<1x16xf32, #tpu.memory_space<vmem>>, %arg6: memref<8x16xf32, #tpu.memory_space<vmem>>) attributes {dimension_semantics = [#tpu.dimension_semantics<parallel>, #tpu.dimension_semantics<parallel>, #tpu.dimension_semantics<arbitrary>], iteration_bounds = array<i64: 1, 1, 1>, scalar_prefetch = 0 : i64, scratch_operands = 0 : i64, tpu.core_type = #tpu.core_type<tc>, window_params = [{transform_indices = @transform_0, window_bounds = array<i64: 8, 32>}, {transform_indices = @transform_1, window_bounds = array<i64: 32, 16>}, {transform_indices = @transform_2, window_bounds = array<i64: 1, 16>}, {transform_indices = @transform_3, window_bounds = array<i64: 8, 16>}]} {
    %c0_i32 = arith.constant 0 : i32
    %0 = arith.cmpi eq, %arg2, %c0_i32 : i32
    %1 = arith.extui %0 : i1 to i32
    %c0_i32_0 = arith.constant 0 : i32
    %2 = arith.cmpi ne, %1, %c0_i32_0 : i32
    scf.if %2 {
      %c0_8 = arith.constant 0 : index
      %c0_9 = arith.constant 0 : index
      %9 = vector.load %arg5[%c0_8, %c0_9] : memref<1x16xf32, #tpu.memory_space<vmem>>, vector<1x16xf32>
      %10 = vector.shape_cast %9 : vector<1x16xf32> to vector<1x16xf32>
      %11 = vector.broadcast %10 : vector<1x16xf32> to vector<8x16xf32>
      %c0_10 = arith.constant 0 : index
      %c0_11 = arith.constant 0 : index
      %12 = vector.load %arg6[%c0_10, %c0_11] : memref<8x16xf32, #tpu.memory_space<vmem>>, vector<8x16xf32>
      tpu.vector_store %arg6[%c0_10, %c0_11], %11 {strides = array<i32>} : memref<8x16xf32, #tpu.memory_space<vmem>>, vector<8x16xf32>,
    } else {
    }
    %c0 = arith.constant 0 : index
    %c0_1 = arith.constant 0 : index
    %3 = vector.load %arg6[%c0, %c0_1] : memref<8x16xf32, #tpu.memory_space<vmem>>, vector<8x16xf32>
    %c0_2 = arith.constant 0 : index
    %c0_3 = arith.constant 0 : index
    %4 = vector.load %arg3[%c0_2, %c0_3] : memref<8x32xf32, #tpu.memory_space<vmem>>, vector<8x32xf32>
    %c0_4 = arith.constant 0 : index
    %c0_5 = arith.constant 0 : index
    %5 = vector.load %arg4[%c0_4, %c0_5] : memref<32x16xf32, #tpu.memory_space<vmem>>, vector<32x16xf32>
    %cst = arith.constant dense<0.000000e+00> : vector<8x16xf32>
    %6 = tpu.matmul %4, %5, %cst {dimension_numbers = #tpu.dot_dimension_numbers<[1], [0], [0], [1], [0, 0, 1, 1], [], []>} : vector<8x32xf32>, vector<32x16xf32>, vector<8x16xf32> -> vector<8x16xf32>
    %7 = arith.addf %3, %6 : vector<8x16xf32>
    %c0_6 = arith.constant 0 : index
    %c0_7 = arith.constant 0 : index
    %8 = vector.load %arg6[%c0_6, %c0_7] : memref<8x16xf32, #tpu.memory_space<vmem>>, vector<8x16xf32>
    tpu.vector_store %arg6[%c0_6, %c0_7], %7 {strides = array<i32>} : memref<8x16xf32, #tpu.memory_space<vmem>>, vector<8x16xf32>,
    return
  }
  func.func @transform_0(%arg0: i32, %arg1: i32, %arg2: i32) -> (i32, i32) {
    %c0_i32 = arith.constant 0 : i32
    return %arg0, %arg2 : i32, i32
  }
  func.func @transform_1(%arg0: i32, %arg1: i32, %arg2: i32) -> (i32, i32) {
    %c0_i32 = arith.constant 0 : i32
    return %arg2, %arg1 : i32, i32
  }
  func.func @transform_2(%arg0: i32, %arg1: i32, %arg2: i32) -> (i32, i32) {
    %c0_i32 = arith.constant 0 : i32
    %c0_i32_0 = arith.constant 0 : i32
    return %c0_i32, %arg1 : i32, i32
  }
  func.func @transform_3(%arg0: i32, %arg1: i32, %arg2: i32) -> (i32, i32) {
    %c0_i32 = arith.constant 0 : i32
    return %arg0, %arg1 : i32, i32
  }
}

</mosaic_0001>

<llo_original>
// kernel: tpu_custom_call.1
$region0: #{tpu_custom_call.1}
  #allocation0 [shape = 'u32[]', space=smem, size = 0x4, offset = 0x4, fixed_abs, tag = 'smem constant byte address 0x4 - core index']
  #allocation1 [shape = 'u32[144,128]{1,0:T(1,128)}', space=vmem, size = 0x12000, scoped, tag = 'internal scratch']
  %s0 = inlined_call_operand.vmem [shape: f32[8,32], index: 0, kind: input, shape index: {}]
  %s1 = inlined_call_operand.vmem [shape: f32[32,16], index: 1, kind: input, shape index: {}]
  %s2 = inlined_call_operand.vmem [shape: f32[1,16], index: 2, kind: input, shape index: {}]
  %s3 = inlined_call_operand.hbm [shape: f32[8,16], index: 3, kind: output, shape index: {}]
  %s4 = sld [smem:[#allocation0]]
  $region26: #{tpu_custom_call.1} parent=0
    _
  %s6 = ssub.s32 1, %s4
  %s7 = scalar_select 0, %s6, %s4
  $region1: #{tpu_custom_call.1} parent=0
    #allocation2 [shape = 'u8[4096]{0}', space=vmem, size = 0x1000, scoped, tag = 'output window, operand 0, single buffered']
    #allocation3 [shape = 's32[1]{0}', space=sflag, size = 0x4, scoped, tag = 'scoped memory for tpu_custom_call.1']
    %8 = vsyncpa [#allocation3], 0
    // Predicated region
    $region2: #{tpu_custom_call.1} parent=1 // pred_check
      _
    $region3: #{tpu_custom_call.1} parent=1 // pred_check_branch
      %10 = sbr.rel (0) target = $region5
    $region4: #{tpu_custom_call.1} parent=1 // pred_region
      _
    $region5: #{tpu_custom_call.1} parent=1 // pred_fallthru
      _
    // Predicated region
    $region6: #{tpu_custom_call.1} parent=1 // pred_check
      _
    $region7: #{tpu_custom_call.1} parent=1 // pred_check_branch
      %12 = sbr.rel (0) target = $region9
    $region8: #{tpu_custom_call.1} parent=1 // pred_region
      _
    $region9: #{tpu_custom_call.1} parent=1 // pred_fallthru
      _
    // Predicated region
    $region10: #{tpu_custom_call.1} parent=1 // pred_check
      _
    $region11: #{tpu_custom_call.1} parent=1 // pred_check_branch
      %14 = sbr.rel (0) target = $region13
    $region12: #{tpu_custom_call.1} parent=1 // pred_region
      _
    $region13: #{tpu_custom_call.1} parent=1 // pred_fallthru
      _
    %p15 = scmp.eq.s32.totalorder 0, 0
    // Predicated region
    $region14: #{tpu_custom_call.1} parent=1 // pred_check
      %p16 = pneg %p15
    $region15: #{tpu_custom_call.1} parent=1 // pred_check_branch
      %18 = sbr.rel (%p16) target = $region17
    $region16: #{tpu_custom_call.1} parent=1 // pred_region
      %v19 = vld [vmem:[%s2] sm:$0x1]
      %v21 = vlaneseq
      %v22 = vshrl.u32 %v21, 7
      %v23 = vsub.s32 0, %v22
      %v24 = vrot.slane %v19, %v23
      %vm26 = vcmask 130048
      %27 = vst.msk [vmem:[#allocation2] sm:$0xff] %vm26, %v24
    $region17: #{tpu_custom_call.1} parent=1 // pred_fallthru
      _
    %v28 = vld [vmem:[#allocation2] sm:$0xff]
    %v29 = vld [vmem:[%s0] sm:$0xff]
    %v30 = vld [vmem:[%s1] sm:$0xff]
    %v31 = vld [vmem:[%s1 + $0x8] sm:$0xff]
    %v32 = vld [vmem:[%s1 + $0x10] sm:$0xff]
    %v33 = vld [vmem:[%s1 + $0x18] sm:$0xff]
    %vm34 = vcmask 261120
    %v36 = vsel %vm34, %v29, 0
    %38 = vmatprep.subr.mxu0 0.0
    %39 = vmatpush1.msra.mxu0 %v30
    %40 = vmatprep.subr.mxu0 0.0
    %41 = vmatpush1.msra.mxu0 %v31
    %42 = vmatprep.subr.mxu0 0.0
    %43 = vmatpush1.msra.mxu0 %v32
    %44 = vmatprep.subr.mxu0 0.0
    %45 = vmatpush1.msra.mxu0 %v33
    %46 = vmatprep.subr.mxu0 0.0
    %47 = vmatpush1.msra.mxu0 0.0
    %48 = vmatprep.subr.mxu0 0.0
    %49 = vmatpush1.msra.mxu0 0.0
    %50 = vmatprep.subr.mxu0 0.0
    %51 = vmatpush1.msra.mxu0 0.0
    %52 = vmatprep.subr.mxu0 0.0
    %53 = vmatpush1.msra.mxu0 0.0
    %54 = vmatprep.subr.mxu0 0.0
    %55 = vmatpush1.msra.mxu0 0.0
    %56 = vmatprep.subr.mxu0 0.0
    %57 = vmatpush1.msra.mxu0 0.0
    %58 = vmatprep.subr.mxu0 0.0
    %59 = vmatpush1.msra.mxu0 0.0
    %60 = vmatprep.subr.mxu0 0.0
    %61 = vmatpush1.msra.mxu0 0.0
    %62 = vmatprep.subr.mxu0 0.0
    %63 = vmatpush1.msra.mxu0 0.0
    %64 = vmatprep.subr.mxu0 0.0
    %65 = vmatpush1.msra.mxu0 0.0
    %66 = vmatprep.subr.mxu0 0.0
    %67 = vmatpush1.msra.mxu0 0.0
    %68 = vmatprep.subr.mxu0 0.0
    %69 = vmatpush1.msra.mxu0 0.0
    %70 = vmatprep.subr.mxu0 0.0
    %71 = vmatpush1.msra.mxu0 0.0
    %72 = vmatprep.subr.mxu0 0.0
    %73 = vmatpush1.msra.mxu0 0.0
    %74 = vmatprep.subr.mxu0 0.0
    %75 = vmatpush1.msra.mxu0 0.0
    %76 = vmatprep.subr.mxu0 0.0
    %77 = vmatpush1.msra.mxu0 0.0
    %78 = vmatprep.subr.mxu0 0.0
    %79 = vmatpush1.msra.mxu0 0.0
    %80 = vmatprep.subr.mxu0 0.0
    %81 = vmatpush1.msra.mxu0 0.0
    %82 = vmatprep.subr.mxu0 0.0
    %83 = vmatpush1.msra.mxu0 0.0
    %84 = vmatprep.subr.mxu0 0.0
    %85 = vmatpush1.msra.mxu0 0.0
    %86 = vmatprep.subr.mxu0 0.0
    %87 = vmatpush1.msra.mxu0 0.0
    %88 = vmatprep.subr.mxu0 0.0
    %89 = vmatpush1.msra.mxu0 0.0
    %90 = vmatprep.subr.mxu0 0.0
    %91 = vmatpush1.msra.mxu0 0.0
    %92 = vmatprep.subr.mxu0 0.0
    %93 = vmatpush1.msra.mxu0 0.0
    %94 = vmatprep.subr.mxu0 0.0
    %95 = vmatpush1.msra.mxu0 0.0
    %96 = vmatprep.subr.mxu0 0.0
    %97 = vmatpush1.msra.mxu0 0.0
    %98 = vmatprep.subr.mxu0 0.0
    %99 = vmatpush1.msra.mxu0 0.0
    %100 = vmatprep.subr.mxu0 0.0
    %101 = vmatpush1.msra.mxu0 0.0
    %102 = vmatprep.mubr.f32.mxu0 0.0
    %103 = vmatmul.mubr.f32.gmra.mrb[0].mxu0 %v36
    %v104 = vpop.f32.mrb[0].mxu0
    %v105 = vadd.f32 0.0, %v104
    %v106 = vpop.f32.mrb[0].mxu0
    %107 = vdwg.mxu0
    %v108 = vadd.f32 %v28, %v105
    %vm109 = vcmask 130048
    %110 = vst.msk [vmem:[#allocation2] sm:$0xff] %vm109, %v108
    // Predicated region
    $region18: #{tpu_custom_call.1} parent=1 // pred_check
      _
    $region19: #{tpu_custom_call.1} parent=1 // pred_check_branch
      %112 = sbr.rel (0) target = $region21
    $region20: #{tpu_custom_call.1} parent=1 // pred_region
      %s114 = ssub.s32 128, 128
      %115 = vsyncadd [#allocation3], %s114
      %s117 = sshll.u32 [#allocation2], 4
      %s118 = int_to_ptr.vmem [resolvable:$true] %s117
      %120 = dma.vmem_to_hbm [thread:$0]  %s118, 128, %s3, [#allocation3]
    $region21: #{tpu_custom_call.1} parent=1 // pred_fallthru
      _
    // Predicated region
    $region22: #{tpu_custom_call.1} parent=1 // pred_check
      _
    $region23: #{tpu_custom_call.1} parent=1 // pred_check_branch
      %122 = sbr.rel (0) target = $region25
    $region24: #{tpu_custom_call.1} parent=1 // pred_region
      %123 = dma.done [#allocation3], 128
    $region25: #{tpu_custom_call.1} parent=1 // pred_fallthru
      _
    %124 = vsyncpa [#allocation3], 1

</llo_original>
